<compile_context>
chip_gen: v7x
topology: tpu7x:2x2x1
jax: 0.10.0
libtpu: 0.0.40
codegen_flags: <defaults>
</compile_context>

<pallas_src>
import jax
import jax.numpy as jnp
from jax.experimental import pallas as pl
from jax.experimental.pallas import tpu as pltpu


def _mean_pool_kernel(h_ref, m_ref, o_ref, cnt_ref):
    """One (h_tile, b_tile, s_tile) grid step of masked mean pooling.

    h_ref:   (bt, st, ht)  hidden states (native dtype, cast to f32 here)
    m_ref:   (bt, st)      attention mask (native dtype, cast to f32 here)
    o_ref:   (bt, ht)      f32 output; doubles as the running masked sum (resident
                           across the S reduction because its block index is constant
                           along the s grid axis)
    cnt_ref: (bt, 1)       f32 running sum of the mask
    """
    s_idx = pl.program_id(2)

    @pl.when(s_idx == 0)
    def _init():
        o_ref[...] = jnp.zeros_like(o_ref)
        cnt_ref[...] = jnp.zeros_like(cnt_ref)

    h = h_ref[...].astype(jnp.float32)          # (bt, st, ht)
    m = m_ref[...].astype(jnp.float32)          # (bt, st)

    # Per-tile masked partial sums; the long S reduction is carried by the grid.
    o_ref[...] += jnp.sum(h * m[:, :, None], axis=1)          # (bt, ht)
    cnt_ref[...] += jnp.sum(m, axis=1, keepdims=True)         # (bt, 1)

    @pl.when(s_idx == pl.num_programs(2) - 1)
    def _finalize():
        denom = jnp.maximum(cnt_ref[...], 1e-9)                # torch.clamp(min=1e-9)
        o_ref[...] = o_ref[...] * pl.reciprocal(denom)         # exact 1/x on the EUP


def _vmem_capacity_bytes():
    try:
        return int(pltpu.get_tpu_info().vmem_capacity_bytes)
    except Exception:
        return 64 << 20  # conservative (v7x-sized) fallback


def _largest_divisor_tile(dim, cap, quantum=128):
    """Largest multiple of `quantum` that divides `dim` and is <= cap.

    Returns `dim` itself (full-dimension block) when `dim` is not a multiple of
    `quantum` -- legal for BlockSpec since a block equal to the full dim is allowed.
    """
    if dim % quantum != 0:
        return dim
    cap = max(quantum, min(cap, dim))
    best = quantum
    d = quantum
    while d <= cap:
        if dim % d == 0:
            best = d
        d += quantum
    return best


def _pick_tiles(B, S, H, itemsize, per_buf_bytes):
    # Batch tile sits on the second-to-last dim of mask/output blocks: multiple of 8
    # or the full batch.
    b_tile = 8 if (B >= 8 and B % 8 == 0) else B
    n_b = B // b_tile

    # H tile: multiple of 128 dividing H (or full H when H is small/awkward).
    # When there is only one batch tile, force >= 2 H tiles (for large H) so the
    # second "parallel" grid axis keeps both v7x TensorCores busy.
    h_cap = 2048
    if n_b == 1 and H % 128 == 0 and H >= 1024:
        h_cap = min(h_cap, H // 2)
    h_tile = _largest_divisor_tile(H, h_cap, 128)

    # S tile: multiple of 128 dividing S, sized so the streamed hidden buffer stays
    # within the per-buffer VMEM budget (full S for tiny/awkward S).
    max_s = max(128, per_buf_bytes // max(1, b_tile * h_tile * itemsize))
    s_tile = _largest_divisor_tile(S, max_s, 128)
    return b_tile, s_tile, h_tile


def mean_pooling(last_hidden_state, attention_mask):
    """last_hidden_state: [B, S, H] (any float dtype), attention_mask: [B, S] -> [B, H] f32."""
    B, S, H = last_hidden_state.shape
    assert attention_mask.shape == (B, S)

    # Keep both tensors in their native HBM dtype; cast per tile inside the kernel.
    h = last_hidden_state
    m = attention_mask
    if m.dtype == jnp.bool_:
        m = m.astype(jnp.int32)  # tiny [B, S] cast; avoids packed-bool layouts

    # Zero-pad S to a multiple of 128 for long, awkward sequences (zero mask => exact),
    # so tiles stay bounded instead of falling back to a full-S block.
    if S > 128 and S % 128 != 0:
        pad_s = (-S) % 128
        h = jnp.pad(h, ((0, 0), (0, pad_s), (0, 0)))
        m = jnp.pad(m, ((0, 0), (0, pad_s)))
    # Zero-pad B to a multiple of 8 for large, awkward batch sizes (rows sliced off below).
    pad_b = 0
    if B > 8 and B % 8 != 0:
        pad_b = (-B) % 8
        h = jnp.pad(h, ((0, pad_b), (0, 0), (0, 0)))
        m = jnp.pad(m, ((0, pad_b), (0, 0)))

    Bp, Sp, _ = h.shape
    itemsize = jnp.dtype(h.dtype).itemsize

    # VMEM budgets per chip generation: v5e/v6e have 128 MiB VMEM (bigger tiles
    # amortize per-step overhead); v7x has 64 MiB physical (leave compiler headroom).
    vmem_cap = _vmem_capacity_bytes()
    big_vmem = vmem_cap >= (100 << 20)
    per_buf_bytes = (16 << 20) if big_vmem else (8 << 20)
    vmem_cap_limit = (96 << 20) if big_vmem else (48 << 20)

    b_tile, s_tile, h_tile = _pick_tiles(Bp, Sp, H, itemsize, per_buf_bytes)
    grid = (H // h_tile, Bp // b_tile, Sp // s_tile)

    m_itemsize = jnp.dtype(m.dtype).itemsize
    h_bytes = b_tile * s_tile * h_tile * itemsize
    m_bytes = b_tile * s_tile * m_itemsize
    o_bytes = b_tile * h_tile * 4
    cnt_bytes = b_tile * 128 * 4
    needed = 2 * (h_bytes + m_bytes + o_bytes) + cnt_bytes
    vmem_limit = int(min(max(2 * needed, 32 << 20), vmem_cap_limit))

    out = pl.pallas_call(
        _mean_pool_kernel,
        out_shape=jax.ShapeDtypeStruct((Bp, H), jnp.float32),
        grid_spec=pltpu.PrefetchScalarGridSpec(
            num_scalar_prefetch=0,
            grid=grid,
            in_specs=[
                pl.BlockSpec((b_tile, s_tile, h_tile), lambda hj, b, s: (b, s, hj)),
                pl.BlockSpec((b_tile, s_tile), lambda hj, b, s: (b, s)),
            ],
            out_specs=pl.BlockSpec((b_tile, h_tile), lambda hj, b, s: (b, hj)),
            scratch_shapes=[
                pltpu.VMEM((b_tile, 1), jnp.float32),   # running sum of the mask
            ],
        ),
        compiler_params=pltpu.CompilerParams(
            dimension_semantics=("parallel", "parallel", "arbitrary"),
            vmem_limit_bytes=vmem_limit,
        ),
    )(h, m)

    return out[:B] if pad_b else out


if __name__ == "__main__":
    key = jax.random.PRNGKey(0)
    k1, _ = jax.random.split(key)

    B, S, H = 2, 8, 32
    last_hidden_state = jax.random.normal(k1, (B, S, H), dtype=jnp.float32)
    # Deterministic 0/1 attention mask (first tokens valid, rest padding).
    lengths = jnp.array([5, 3], dtype=jnp.int32)
    attention_mask = (jnp.arange(S)[None, :] < lengths[:, None]).astype(jnp.int32)

    out = mean_pooling(last_hidden_state, attention_mask)
    out = jax.block_until_ready(out)

    # Pure-JAX reference (same math as the PyTorch forward).
    mref = attention_mask.astype(jnp.float32)[..., None]
    ref = jnp.sum(last_hidden_state * mref, axis=1) / jnp.maximum(jnp.sum(mref, axis=1), 1e-9)
    assert out.shape == ref.shape
    assert jnp.allclose(out, ref, atol=1e-5, rtol=1e-5), float(jnp.max(jnp.abs(out - ref)))

    print("KERNEL_OK")
</pallas_src>

<mosaic_0001>
module attributes {stable_mosaic.version = 11 : i64} {
  func.func @_mean_pool_kernel(%arg0: i32, %arg1: i32, %arg2: i32, %arg3: memref<2x8x32xf32, #tpu.memory_space<vmem>>, %arg4: memref<2x8xi32, #tpu.memory_space<vmem>>, %arg5: memref<2x32xf32, #tpu.memory_space<vmem>>, %arg6: memref<2x1xf32, #tpu.memory_space<vmem>>) attributes {dimension_semantics = [#tpu.dimension_semantics<parallel>, #tpu.dimension_semantics<parallel>, #tpu.dimension_semantics<arbitrary>], iteration_bounds = array<i64: 1, 1, 1>, scalar_prefetch = 0 : i64, scratch_operands = 1 : i64, tpu.core_type = #tpu.core_type<tc>, window_params = [{transform_indices = @transform_0, window_bounds = array<i64: 2, 8, 32>}, {transform_indices = @transform_1, window_bounds = array<i64: 2, 8>}, {transform_indices = @transform_2, window_bounds = array<i64: 2, 32>}]} {
    %c0_i32 = arith.constant 0 : i32
    %0 = arith.cmpi eq, %arg2, %c0_i32 : i32
    %1 = arith.extui %0 : i1 to i32
    %c0_i32_0 = arith.constant 0 : i32
    %2 = arith.cmpi ne, %1, %c0_i32_0 : i32
    scf.if %2 {
      %cst_16 = arith.constant 0.000000e+00 : f32
      %21 = vector.broadcast %cst_16 : f32 to vector<2x32xf32>
      %c0_17 = arith.constant 0 : index
      %c0_18 = arith.constant 0 : index
      %22 = vector.load %arg5[%c0_17, %c0_18] : memref<2x32xf32, #tpu.memory_space<vmem>>, vector<2x32xf32>
      tpu.vector_store %arg5[%c0_17, %c0_18], %21 {strides = array<i32>} : memref<2x32xf32, #tpu.memory_space<vmem>>, vector<2x32xf32>,
      %cst_19 = arith.constant 0.000000e+00 : f32
      %23 = vector.broadcast %cst_19 : f32 to vector<2x1xf32>
      %c0_20 = arith.constant 0 : index
      %c0_21 = arith.constant 0 : index
      %24 = vector.load %arg6[%c0_20, %c0_21] : memref<2x1xf32, #tpu.memory_space<vmem>>, vector<2x1xf32>
      tpu.vector_store %arg6[%c0_20, %c0_21], %23 {strides = array<i32>} : memref<2x1xf32, #tpu.memory_space<vmem>>, vector<2x1xf32>,
    } else {
    }
    %c0 = arith.constant 0 : index
    %c0_1 = arith.constant 0 : index
    %c0_2 = arith.constant 0 : index
    %3 = vector.load %arg3[%c0, %c0_1, %c0_2] : memref<2x8x32xf32, #tpu.memory_space<vmem>>, vector<2x8x32xf32>
    %c0_3 = arith.constant 0 : index
    %c0_4 = arith.constant 0 : index
    %4 = vector.load %arg4[%c0_3, %c0_4] : memref<2x8xi32, #tpu.memory_space<vmem>>, vector<2x8xi32>
    %5 = arith.sitofp %4 : vector<2x8xi32> to vector<2x8xf32>
    %c0_5 = arith.constant 0 : index
    %c0_6 = arith.constant 0 : index
    %6 = vector.load %arg5[%c0_5, %c0_6] : memref<2x32xf32, #tpu.memory_space<vmem>>, vector<2x32xf32>
    %7 = vector.shape_cast %5 : vector<2x8xf32> to vector<2x8x1xf32>
    %8 = vector.broadcast %7 : vector<2x8x1xf32> to vector<2x8x32xf32>
    %9 = arith.mulf %3, %8 : vector<2x8x32xf32>
    %cst = arith.constant dense<0.000000e+00> : vector<2x32xf32>
    %10 = vector.multi_reduction <add>, %9, %cst [1] : vector<2x8x32xf32> to vector<2x32xf32>
    %11 = arith.addf %6, %10 : vector<2x32xf32>
    %c0_7 = arith.constant 0 : index
    %c0_8 = arith.constant 0 : index
    %12 = vector.load %arg5[%c0_7, %c0_8] : memref<2x32xf32, #tpu.memory_space<vmem>>, vector<2x32xf32>
    tpu.vector_store %arg5[%c0_7, %c0_8], %11 {strides = array<i32>} : memref<2x32xf32, #tpu.memory_space<vmem>>, vector<2x32xf32>,
    %c0_9 = arith.constant 0 : index
    %c0_10 = arith.constant 0 : index
    %13 = vector.load %arg6[%c0_9, %c0_10] : memref<2x1xf32, #tpu.memory_space<vmem>>, vector<2x1xf32>
    %cst_11 = arith.constant dense<0.000000e+00> : vector<2xf32>
    %14 = vector.multi_reduction <add>, %5, %cst_11 [1] : vector<2x8xf32> to vector<2xf32>
    %15 = vector.shape_cast %14 : vector<2xf32> to vector<2x1xf32>
    %16 = arith.addf %13, %15 : vector<2x1xf32>
    %c0_12 = arith.constant 0 : index
    %c0_13 = arith.constant 0 : index
    %17 = vector.load %arg6[%c0_12, %c0_13] : memref<2x1xf32, #tpu.memory_space<vmem>>, vector<2x1xf32>
    tpu.vector_store %arg6[%c0_12, %c0_13], %16 {strides = array<i32>} : memref<2x1xf32, #tpu.memory_space<vmem>>, vector<2x1xf32>,
    %c0_i32_14 = arith.constant 0 : i32
    %18 = arith.cmpi eq, %arg2, %c0_i32_14 : i32
    %19 = arith.extui %18 : i1 to i32
    %c0_i32_15 = arith.constant 0 : i32
    %20 = arith.cmpi ne, %19, %c0_i32_15 : i32
    scf.if %20 {
      %c0_16 = arith.constant 0 : index
      %c0_17 = arith.constant 0 : index
      %21 = vector.load %arg6[%c0_16, %c0_17] : memref<2x1xf32, #tpu.memory_space<vmem>>, vector<2x1xf32>
      %cst_18 = arith.constant 9.99999971E-10 : f32
      %22 = vector.broadcast %cst_18 : f32 to vector<2x1xf32>
      %23 = arith.maximumf %21, %22 : vector<2x1xf32>
      %c0_19 = arith.constant 0 : index
      %c0_20 = arith.constant 0 : index
      %24 = vector.load %arg5[%c0_19, %c0_20] : memref<2x32xf32, #tpu.memory_space<vmem>>, vector<2x32xf32>
      %25 = tpu.reciprocal %23 : vector<2x1xf32> -> vector<2x1xf32>
      %26 = vector.broadcast %25 : vector<2x1xf32> to vector<2x32xf32>
      %27 = arith.mulf %24, %26 : vector<2x32xf32>
      %c0_21 = arith.constant 0 : index
      %c0_22 = arith.constant 0 : index
      %28 = vector.load %arg5[%c0_21, %c0_22] : memref<2x32xf32, #tpu.memory_space<vmem>>, vector<2x32xf32>
      tpu.vector_store %arg5[%c0_21, %c0_22], %27 {strides = array<i32>} : memref<2x32xf32, #tpu.memory_space<vmem>>, vector<2x32xf32>,
    } else {
    }
    return
  }
  func.func @transform_0(%arg0: i32, %arg1: i32, %arg2: i32) -> (i32, i32, i32) {
    %c0_i32 = arith.constant 0 : i32
    return %arg1, %arg2, %arg0 : i32, i32, i32
  }
  func.func @transform_1(%arg0: i32, %arg1: i32, %arg2: i32) -> (i32, i32) {
    %c0_i32 = arith.constant 0 : i32
    return %arg1, %arg2 : i32, i32
  }
  func.func @transform_2(%arg0: i32, %arg1: i32, %arg2: i32) -> (i32, i32) {
    %c0_i32 = arith.constant 0 : i32
    return %arg1, %arg0 : i32, i32
  }
}

</mosaic_0001>

<llo_original>
// kernel: tpu_custom_call.1
$region0: #{tpu_custom_call.1}
  #allocation0 [shape = 'u32[]', space=smem, size = 0x4, offset = 0x4, fixed_abs, tag = 'smem constant byte address 0x4 - core index']
  #allocation1 [shape = 'u32[144,128]{1,0:T(1,128)}', space=vmem, size = 0x12000, scoped, tag = 'internal scratch']
  #allocation2 [shape = 'f32[2,1]{1,0:T(2,128)}', space=vmem, size = 0x400, scoped, tag = 'scratch operand']
  %s0 = inlined_call_operand.hbm [shape: f32[2,8,32], index: 0, kind: input, shape index: {}]
  %s1 = inlined_call_operand.vmem [shape: s32[2,8], index: 1, kind: input, shape index: {}]
  %s2 = inlined_call_operand.hbm [shape: f32[2,32], index: 2, kind: output, shape index: {}]
  %s3 = sld [smem:[#allocation0]]
  $region30: #{tpu_custom_call.1} parent=0
    _
  %s5 = ssub.s32 1, %s3
  %s6 = scalar_select 0, %s5, %s3
  $region1: #{tpu_custom_call.1} parent=0
    #allocation3 [shape = 'u8[8192]{0}', space=vmem, size = 0x2000, scoped, tag = 'input window, operand 0, single buffered']
    #allocation4 [shape = 's32[1]{0}', space=sflag, size = 0x4, scoped, tag = 'scoped memory for tpu_custom_call.1']
    #allocation5 [shape = 's32[1]{0}', space=sflag, size = 0x4, scoped, tag = 'scoped memory for tpu_custom_call.1']
    #allocation6 [shape = 'u8[1024]{0}', space=vmem, size = 0x400, scoped, tag = 'output window, operand 0, single buffered']
    %7 = vsyncpa [#allocation4], 0
    %8 = vsyncpa [#allocation5], 0
    // Predicated region
    $region2: #{tpu_custom_call.1} parent=1 // pred_check
      _
    $region3: #{tpu_custom_call.1} parent=1 // pred_check_branch
      %10 = sbr.rel (0) target = $region5
    $region4: #{tpu_custom_call.1} parent=1 // pred_region
      %s12 = ssub.s32 256, 256
      %13 = vsyncadd [#allocation4], %s12
      %s14 = sshll.u32 [#allocation3], 4
      %s15 = int_to_ptr.vmem [resolvable:$true] %s14
      %20 = dma.hbm_to_vmem [thread:$0]  %s0, 256, %s15, [#allocation4], 128, 128, 8
    $region5: #{tpu_custom_call.1} parent=1 // pred_fallthru
      _
    // Predicated region
    $region6: #{tpu_custom_call.1} parent=1 // pred_check
      _
    $region7: #{tpu_custom_call.1} parent=1 // pred_check_branch
      %22 = sbr.rel (0) target = $region9
    $region8: #{tpu_custom_call.1} parent=1 // pred_region
      _
    $region9: #{tpu_custom_call.1} parent=1 // pred_fallthru
      _
    // Predicated region
    $region10: #{tpu_custom_call.1} parent=1 // pred_check
      _
    $region11: #{tpu_custom_call.1} parent=1 // pred_check_branch
      %24 = sbr.rel (0) target = $region13
    $region12: #{tpu_custom_call.1} parent=1 // pred_region
      %25 = dma.done [#allocation4], 256
    $region13: #{tpu_custom_call.1} parent=1 // pred_fallthru
      _
    %p26 = scmp.eq.s32.totalorder 0, 0
    // Predicated region
    $region14: #{tpu_custom_call.1} parent=1 // pred_check
      %p27 = pneg %p26
    $region15: #{tpu_custom_call.1} parent=1 // pred_check_branch
      %29 = sbr.rel (%p27) target = $region17
    $region16: #{tpu_custom_call.1} parent=1 // pred_region
      %vm30 = vcmask 254976
      %31 = vst.msk [vmem:[#allocation6] sm:$0x3] %vm30, 0.0
      %vm32 = vcmask 1024
      %33 = vst.msk [vmem:[#allocation2] sm:$0x3] %vm32, 0.0
    $region17: #{tpu_custom_call.1} parent=1 // pred_fallthru
      _
    %v34 = vld [vmem:[#allocation3] sm:$0xff]
    %v35 = vld [vmem:[#allocation3 + $0x8] sm:$0xff]
    %v36 = vld [vmem:[%s1] sm:$0x3]
    %v37 = vcvt.s32.f32 %v36
    %v38 = vld [vmem:[#allocation6] sm:$0x3]
    %v39 = vlaneseq
    %v40 = vshrl.u32 %v39, 7
    %v41 = vsub.s32 0, %v40
    %v42 = vrot.slane %v37, %v41
    %44 = vbcast.lane.b32.xlu0 %v42, 256
    %v45 = vpop.permute.xlu0 %44
    %v46 = vlaneseq
    %v47 = vshrl.u32 %v46, 7
    %v48 = vsub.s32 1, %v47
    %v49 = vrot.slane %v37, %v48
    %51 = vbcast.lane.b32.xlu0 %v49, 256
    %v52 = vpop.permute.xlu0 %51
    %v53 = vmul.f32 %v34, %v45
    %v54 = vmul.f32 %v35, %v52
    %vm55 = vcmask 261120
    %v56 = vsel %vm55, %v53, 0.0
    %v57 = vrot.slane %v56, 4
    %v58 = vadd.f32 %v56, %v57
    %v59 = vrot.slane %v58, 2
    %v60 = vadd.f32 %v58, %v59
    %v61 = vrot.slane %v60, 1
    %v62 = vadd.f32 %v60, %v61
    %v63 = vsel %vm55, %v54, 0.0
    %v64 = vrot.slane %v63, 4
    %v65 = vadd.f32 %v63, %v64
    %v66 = vrot.slane %v65, 2
    %v67 = vadd.f32 %v65, %v66
    %v68 = vrot.slane %v67, 1
    %v69 = vadd.f32 %v67, %v68
    %vm72 = vcmask 1041409
    %v73 = vsel %vm72, %v69, %v62
    %v75 = vadd.f32 %v38, %v73
    %vm76 = vcmask 254976
    %77 = vst.msk [vmem:[#allocation6] sm:$0x3] %vm76, %v75
    %v78 = vld [vmem:[#allocation2] sm:$0x3]
    %vm79 = vcmask 58368
    %v80 = vsel %vm79, %v37, 0.0
    %81 = vadd.xlane.f32.xlu0 %v80
    %v82 = vpop.xlane.xlu0 %81
    %v83 = vadd.f32 %v78, %v82
    %vm84 = vcmask 1024
    %85 = vst.msk [vmem:[#allocation2] sm:$0x3] %vm84, %v83
    // Predicated region
    $region18: #{tpu_custom_call.1} parent=1 // pred_check
      %p86 = pneg %p26
    $region19: #{tpu_custom_call.1} parent=1 // pred_check_branch
      %88 = sbr.rel (%p86) target = $region21
    $region20: #{tpu_custom_call.1} parent=1 // pred_region
      %v89 = vld [vmem:[#allocation2] sm:$0x3]
      %v90 = vmax.f32 %v89, 1e-09
      %v91 = vld [vmem:[#allocation6] sm:$0x3]
      %v92 = vrcp.pop %v90
      %94 = vset.pattern.permute.xlu0 0
      %95 = vperm.xlu0 %94, %v92
      %v96 = vpop.permute.xlu0 %95
      %v98 = vmul.f32 %v91, %v96
      %99 = vst.msk [vmem:[#allocation6] sm:$0x3] %vm76, %v98
    $region21: #{tpu_custom_call.1} parent=1 // pred_fallthru
      _
    // Predicated region
    $region22: #{tpu_custom_call.1} parent=1 // pred_check
      _
    $region23: #{tpu_custom_call.1} parent=1 // pred_check_branch
      %101 = sbr.rel (0) target = $region25
    $region24: #{tpu_custom_call.1} parent=1 // pred_region
      %s103 = ssub.s32 32, 32
      %104 = vsyncadd [#allocation5], %s103
      %s106 = sshll.u32 [#allocation6], 4
      %s107 = int_to_ptr.vmem [resolvable:$true] %s106
      %109 = dma.vmem_to_hbm [thread:$0]  %s107, 32, %s2, [#allocation5]
    $region25: #{tpu_custom_call.1} parent=1 // pred_fallthru
      _
    // Predicated region
    $region26: #{tpu_custom_call.1} parent=1 // pred_check
      _
    $region27: #{tpu_custom_call.1} parent=1 // pred_check_branch
      %111 = sbr.rel (0) target = $region29
    $region28: #{tpu_custom_call.1} parent=1 // pred_region
      %112 = dma.done [#allocation5], 32
    $region29: #{tpu_custom_call.1} parent=1 // pred_fallthru
      _
    %113 = vsyncpa [#allocation4], 1
    %114 = vsyncpa [#allocation5], 1

</llo_original>
